<compile_context>
chip_gen: v7x
topology: tpu7x:2x2x1
jax: 0.10.0
libtpu: 0.0.40
codegen_flags: <defaults>
</compile_context>

<pallas_src>
import functools

import jax
import jax.numpy as jnp
from jax import lax
from jax.experimental import pallas as pl
from jax.experimental.pallas import tpu as pltpu


LN_EPS = 1e-5


def _choose_block_n(n):
    """Largest power-of-two row tile (<= 512) that is <= n; else n itself."""
    for tn in (512, 256, 128, 64, 32, 16, 8):
        if n >= tn:
            return tn
    return n


def _mlp_attn_kernel(
    x_ref,       # (TN, D)  current tile of stacked samples
    w1_ref,      # (D, H)   fc1 weight (resident across the grid)
    vecs_ref,    # (5, H)   rows: b1, ln_gamma, ln_beta, w2^T, wo^T
    scal_ref,    # (7,)     SMEM: b2, b3, bo, w3[0], w3[1], w3[2], w3[3]
    out_ref,     # (1, 1)
    m_s,         # (1, 1)   running max of fc2 logits
    l_s,         # (1, 1)   running sum of exp(logit - m)
    acc_s,       # (1, H)   running sum of exp(logit - m) * x1
    sum_s,       # (1, H)   running sum of x1
    max_s,       # (1, H)   running max of x1
    min_s,       # (1, H)   running min of x1
    *, n_total, block_n, use_bf16,
):
    i = pl.program_id(0)
    last = pl.num_programs(0) - 1

    @pl.when(i == 0)
    def _init():
        m_s[...] = jnp.full_like(m_s, -jnp.inf)
        l_s[...] = jnp.zeros_like(l_s)
        acc_s[...] = jnp.zeros_like(acc_s)
        sum_s[...] = jnp.zeros_like(sum_s)
        max_s[...] = jnp.full_like(max_s, -jnp.inf)
        min_s[...] = jnp.full_like(min_s, jnp.inf)

    b1 = vecs_ref[0:1, :]
    gamma = vecs_ref[1:2, :]
    beta = vecs_ref[2:3, :]
    w2_t = vecs_ref[3:4, :]

    x = x_ref[...]
    if use_bf16:
        # Review item: bf16 MXU inputs with f32 accumulate for large D, H.
        h = jnp.dot(x.astype(jnp.bfloat16), w1_ref[...].astype(jnp.bfloat16),
                    preferred_element_type=jnp.float32)
    else:
        h = jnp.dot(x.astype(jnp.float32), w1_ref[...],
                    preferred_element_type=jnp.float32)
    h = jnp.maximum(h + b1, 0.0)

    # LayerNorm over the feature (lane) axis.
    mu = jnp.mean(h, axis=-1, keepdims=True)
    var = jnp.mean((h - mu) * (h - mu), axis=-1, keepdims=True)
    x1 = (h - mu) * lax.rsqrt(var + LN_EPS) * gamma + beta            # (TN, H)

    # fc2 as a VPU multiply + lane reduce (no thin MXU matmul).
    logits = jnp.sum(x1 * w2_t, axis=-1, keepdims=True) + scal_ref[0]  # (TN, 1)

    needs_mask = (n_total % block_n) != 0
    if needs_mask:
        row = i * block_n + lax.broadcasted_iota(jnp.int32, (block_n, 1), 0)
        valid = row < n_total
        logits = jnp.where(valid, logits, -jnp.inf)
        x1_zero = jnp.where(valid, x1, 0.0)
        x1_neg = jnp.where(valid, x1, -jnp.inf)
        x1_pos = jnp.where(valid, x1, jnp.inf)
    else:
        x1_zero = x1_neg = x1_pos = x1

    # Online softmax over the stacked axis (axis 0), fused with the
    # attention-pooled accumulation hidden_0 = sum_n softmax_n * x1[n].
    m_old = m_s[...]
    m_new = jnp.maximum(m_old, jnp.max(logits, axis=0, keepdims=True))
    alpha = jnp.exp(m_old - m_new)
    p = jnp.exp(logits - m_new)                                        # (TN, 1)
    l_s[...] = alpha * l_s[...] + jnp.sum(p, axis=0, keepdims=True)
    acc_s[...] = alpha * acc_s[...] + jnp.sum(p * x1_zero, axis=0, keepdims=True)
    m_s[...] = m_new

    # Running mean/max/min statistics of x1 over the stacked axis.
    sum_s[...] = sum_s[...] + jnp.sum(x1_zero, axis=0, keepdims=True)
    max_s[...] = jnp.maximum(max_s[...], jnp.max(x1_neg, axis=0, keepdims=True))
    min_s[...] = jnp.minimum(min_s[...], jnp.min(x1_pos, axis=0, keepdims=True))

    @pl.when(i == last)
    def _finalize():
        wo_t = vecs_ref[4:5, :]
        l = l_s[...]
        inv_l = pl.reciprocal(l, approx=True)       # EUP fast path (review item)
        inv_l = inv_l * (2.0 - l * inv_l)           # one Newton step -> f32 exact
        hidden0 = acc_s[...] * inv_l                # (1, H) attention-pooled
        hidden1 = sum_s[...] * (1.0 / n_total)      # (1, H) mean over N
        hidden2 = max_s[...]                        # (1, H) max over N
        hidden3 = min_s[...]                        # (1, H) min over N
        # fc3 as four scalar FMAs (no concat / transpose / thin matmul).
        x3t = (scal_ref[3] * hidden0 + scal_ref[4] * hidden1 +
               scal_ref[5] * hidden2 + scal_ref[6] * hidden3 + scal_ref[1])
        x3t = jnp.maximum(x3t, 0.0)                 # (1, H)
        # Output layer as a VPU multiply + lane reduce.
        out = jnp.sum(x3t * wo_t, axis=-1, keepdims=True) + scal_ref[2]
        out_ref[...] = out.astype(out_ref.dtype)


def mlp_attention_sigmoid_new(arrays, params, *, block_n=None, use_bf16_matmul=None):
    """Pallas forward. arrays: (N, input_dim) float32. Returns (1, 1) float32."""
    (w1, b1, gamma, beta, w2, b2, w3, b3, wo, bo) = params
    n, d = arrays.shape
    hdim = w1.shape[1]
    f32 = jnp.float32

    # Row-tile over the stacked axis: keep tiles (8,)-aligned and small enough
    # for v7x's 64-MiB per-TC VMEM even when D/H are large.
    if block_n is None:
        block_n = _choose_block_n(n)
    block_n = max(1, min(block_n, n))
    if n >= 8:
        block_n = max(8, (block_n // 8) * 8)
    num_blocks = pl.cdiv(n, block_n)

    # Pack parameters: one lane-dense (5, H) VMEM array + one 1-D SMEM array.
    vecs = jnp.concatenate(
        [jnp.reshape(b1, (1, hdim)), jnp.reshape(gamma, (1, hdim)),
         jnp.reshape(beta, (1, hdim)), jnp.reshape(w2, (1, hdim)),
         jnp.reshape(wo, (1, hdim))], axis=0).astype(f32)            # (5, H)
    scalars = jnp.concatenate(
        [jnp.reshape(b2, (-1,)), jnp.reshape(b3, (-1,)),
         jnp.reshape(bo, (-1,)), jnp.reshape(w3, (-1,))]).astype(f32)  # (7,)

    if use_bf16_matmul is None:
        # Review item: bf16 fc1 only pays off once D and H reach the hundreds.
        use_bf16_matmul = (d >= 256 and hdim >= 256)

    kernel = functools.partial(
        _mlp_attn_kernel,
        n_total=n, block_n=block_n, use_bf16=bool(use_bf16_matmul))

    return pl.pallas_call(
        kernel,
        out_shape=jax.ShapeDtypeStruct((1, 1), jnp.float32),
        grid_spec=pltpu.PrefetchScalarGridSpec(
            num_scalar_prefetch=0,
            grid=(num_blocks,),
            in_specs=[
                pl.BlockSpec((block_n, d), lambda i: (i, 0)),        # x tile
                pl.BlockSpec((d, hdim), lambda i: (0, 0)),           # w1 (resident)
                pl.BlockSpec((5, hdim), lambda i: (0, 0)),           # packed vectors
                pl.BlockSpec(memory_space=pltpu.MemorySpace.SMEM),   # packed scalars
            ],
            out_specs=pl.BlockSpec((1, 1), lambda i: (0, 0)),
            scratch_shapes=[
                pltpu.VMEM((1, 1), f32),      # running logit max
                pltpu.VMEM((1, 1), f32),      # running exp-sum
                pltpu.VMEM((1, hdim), f32),   # softmax-weighted sum of x1
                pltpu.VMEM((1, hdim), f32),   # sum of x1
                pltpu.VMEM((1, hdim), f32),   # max of x1
                pltpu.VMEM((1, hdim), f32),   # min of x1
            ],
        ),
        compiler_params=pltpu.CompilerParams(
            # The single grid axis is a reduction over N -> "arbitrary".
            # TODO(synk): if several independent (N, D) samples are evaluated,
            # add a leading batch grid axis marked "parallel" (2 TCs on v7x).
            dimension_semantics=("arbitrary",),
            # Tiles are sized against v7x's 64-MiB VMEM; 32 MiB scoped is ample
            # on every generation.
            vmem_limit_bytes=32 * 1024 * 1024,
        ),
    )(arrays, w1.astype(f32), vecs, scalars)


def init_params(key, input_dim, hidden_dim):
    """Deterministic init mimicking torch.nn.Linear (uniform +-1/sqrt(fan_in))."""
    ks = jax.random.split(key, 8)

    def lin(kw, kb, fan_in, fan_out):
        bound = 1.0 / jnp.sqrt(jnp.float32(fan_in))
        w = jax.random.uniform(kw, (fan_in, fan_out), jnp.float32, -bound, bound)
        b = jax.random.uniform(kb, (1, fan_out), jnp.float32, -bound, bound)
        return w, b

    w1, b1 = lin(ks[0], ks[1], input_dim, hidden_dim)   # fc1
    w2, b2 = lin(ks[2], ks[3], hidden_dim, 1)           # fc2
    w3, b3 = lin(ks[4], ks[5], 4, 1)                    # fc3
    wo, bo = lin(ks[6], ks[7], hidden_dim, 1)           # output
    gamma = jnp.ones((1, hidden_dim), jnp.float32)      # ln.weight
    beta = jnp.zeros((1, hidden_dim), jnp.float32)      # ln.bias
    return (w1, b1, gamma, beta, w2, b2, w3, b3, wo, bo)


def reference_forward(arrays, params):
    """Pure-JAX reference mirroring the PyTorch code exactly."""
    (w1, b1, gamma, beta, w2, b2, w3, b3, wo, bo) = params
    h = jnp.maximum(arrays @ w1 + b1, 0.0)
    mu = jnp.mean(h, axis=-1, keepdims=True)
    var = jnp.mean((h - mu) ** 2, axis=-1, keepdims=True)
    x1 = (h - mu) / jnp.sqrt(var + LN_EPS) * gamma + beta
    x2 = jax.nn.softmax(x1 @ w2 + b2, axis=0)                 # (N, 1)
    hidden_0 = (x1.T @ x2)                                     # (H, 1)
    hidden_1 = jnp.mean(x1, axis=0)
    hidden_2 = jnp.max(x1, axis=0)
    hidden_3 = jnp.min(x1, axis=0)
    hidden = jnp.stack((hidden_0[:, 0], hidden_1, hidden_2, hidden_3))  # (4, H)
    x3 = jnp.maximum(hidden.T @ w3 + b3, 0.0)                  # (H, 1)
    return x3.T @ wo + bo                                      # (1, 1)


if __name__ == "__main__":
    # Config 1: module-sized toy shapes (single grid step).
    N, INPUT_DIM, HIDDEN_DIM = 8, 16, 32
    key = jax.random.PRNGKey(0)
    k_x, k_p = jax.random.split(key)
    arrays = jax.random.normal(k_x, (N, INPUT_DIM), jnp.float32)
    params = init_params(k_p, INPUT_DIM, HIDDEN_DIM)

    out = jax.block_until_ready(mlp_attention_sigmoid_new(arrays, params))
    ref = reference_forward(arrays, params)
    assert out.shape == (1, 1)
    assert jnp.allclose(out, ref, atol=1e-4, rtol=1e-4), (out, ref)

    # Config 2: exercises multiple grid steps + a ragged (masked) last block,
    # i.e. the online-softmax / running-stat accumulator path.
    N2, D2, H2 = 20, 16, 32
    arrays2 = jax.random.normal(jax.random.PRNGKey(3), (N2, D2), jnp.float32)
    params2 = init_params(jax.random.PRNGKey(4), D2, H2)
    out2 = jax.block_until_ready(
        mlp_attention_sigmoid_new(arrays2, params2, block_n=8))
    ref2 = reference_forward(arrays2, params2)
    assert jnp.allclose(out2, ref2, atol=1e-4, rtol=1e-4), (out2, ref2)

    print("KERNEL_OK")
</pallas_src>

<mosaic_0001>
module attributes {stable_mosaic.version = 11 : i64} {
  func.func @_mlp_attn_kernel(%arg0: i32, %arg1: memref<8x16xf32, #tpu.memory_space<vmem>>, %arg2: memref<16x32xf32, #tpu.memory_space<vmem>>, %arg3: memref<5x32xf32, #tpu.memory_space<vmem>>, %arg4: memref<7xf32, #tpu.memory_space<smem>>, %arg5: memref<1x1xf32, #tpu.memory_space<vmem>>, %arg6: memref<1x1xf32, #tpu.memory_space<vmem>>, %arg7: memref<1x1xf32, #tpu.memory_space<vmem>>, %arg8: memref<1x32xf32, #tpu.memory_space<vmem>>, %arg9: memref<1x32xf32, #tpu.memory_space<vmem>>, %arg10: memref<1x32xf32, #tpu.memory_space<vmem>>, %arg11: memref<1x32xf32, #tpu.memory_space<vmem>>) attributes {dimension_semantics = [#tpu.dimension_semantics<arbitrary>], iteration_bounds = array<i64: 1>, scalar_prefetch = 0 : i64, scratch_operands = 6 : i64, tpu.core_type = #tpu.core_type<tc>, window_params = [{transform_indices = @transform_0, window_bounds = array<i64: 8, 16>}, {pipeline_mode = #tpu.pipeline_mode<synchronous>, transform_indices = @transform_1, window_bounds = array<i64: 16, 32>}, {pipeline_mode = #tpu.pipeline_mode<synchronous>, transform_indices = @transform_2, window_bounds = array<i64: 5, 32>}, {transform_indices = @transform_3, window_bounds = array<i64: 7>}, {pipeline_mode = #tpu.pipeline_mode<synchronous>, transform_indices = @transform_4, window_bounds = array<i64: 1, 1>}]} {
    %c0_i32 = arith.constant 0 : i32
    %0 = arith.cmpi eq, %arg0, %c0_i32 : i32
    %1 = arith.extui %0 : i1 to i32
    %c0_i32_0 = arith.constant 0 : i32
    %2 = arith.cmpi ne, %1, %c0_i32_0 : i32
    scf.if %2 {
      %cst_49 = arith.constant 0xFF800000 : f32
      %88 = vector.broadcast %cst_49 : f32 to vector<1x1xf32>
      %c0_50 = arith.constant 0 : index
      %c0_51 = arith.constant 0 : index
      %89 = vector.load %arg6[%c0_50, %c0_51] : memref<1x1xf32, #tpu.memory_space<vmem>>, vector<1x1xf32>
      tpu.vector_store %arg6[%c0_50, %c0_51], %88 {strides = array<i32>} : memref<1x1xf32, #tpu.memory_space<vmem>>, vector<1x1xf32>,
      %cst_52 = arith.constant 0.000000e+00 : f32
      %90 = vector.broadcast %cst_52 : f32 to vector<1x1xf32>
      %c0_53 = arith.constant 0 : index
      %c0_54 = arith.constant 0 : index
      %91 = vector.load %arg7[%c0_53, %c0_54] : memref<1x1xf32, #tpu.memory_space<vmem>>, vector<1x1xf32>
      tpu.vector_store %arg7[%c0_53, %c0_54], %90 {strides = array<i32>} : memref<1x1xf32, #tpu.memory_space<vmem>>, vector<1x1xf32>,
      %cst_55 = arith.constant 0.000000e+00 : f32
      %92 = vector.broadcast %cst_55 : f32 to vector<1x32xf32>
      %c0_56 = arith.constant 0 : index
      %c0_57 = arith.constant 0 : index
      %93 = vector.load %arg8[%c0_56, %c0_57] : memref<1x32xf32, #tpu.memory_space<vmem>>, vector<1x32xf32>
      tpu.vector_store %arg8[%c0_56, %c0_57], %92 {strides = array<i32>} : memref<1x32xf32, #tpu.memory_space<vmem>>, vector<1x32xf32>,
      %cst_58 = arith.constant 0.000000e+00 : f32
      %94 = vector.broadcast %cst_58 : f32 to vector<1x32xf32>
      %c0_59 = arith.constant 0 : index
      %c0_60 = arith.constant 0 : index
      %95 = vector.load %arg9[%c0_59, %c0_60] : memref<1x32xf32, #tpu.memory_space<vmem>>, vector<1x32xf32>
      tpu.vector_store %arg9[%c0_59, %c0_60], %94 {strides = array<i32>} : memref<1x32xf32, #tpu.memory_space<vmem>>, vector<1x32xf32>,
      %cst_61 = arith.constant 0xFF800000 : f32
      %96 = vector.broadcast %cst_61 : f32 to vector<1x32xf32>
      %c0_62 = arith.constant 0 : index
      %c0_63 = arith.constant 0 : index
      %97 = vector.load %arg10[%c0_62, %c0_63] : memref<1x32xf32, #tpu.memory_space<vmem>>, vector<1x32xf32>
      tpu.vector_store %arg10[%c0_62, %c0_63], %96 {strides = array<i32>} : memref<1x32xf32, #tpu.memory_space<vmem>>, vector<1x32xf32>,
      %cst_64 = arith.constant 0x7F800000 : f32
      %98 = vector.broadcast %cst_64 : f32 to vector<1x32xf32>
      %c0_65 = arith.constant 0 : index
      %c0_66 = arith.constant 0 : index
      %99 = vector.load %arg11[%c0_65, %c0_66] : memref<1x32xf32, #tpu.memory_space<vmem>>, vector<1x32xf32>
      tpu.vector_store %arg11[%c0_65, %c0_66], %98 {strides = array<i32>} : memref<1x32xf32, #tpu.memory_space<vmem>>, vector<1x32xf32>,
    } else {
    }
    %c0 = arith.constant 0 : index
    %c0_1 = arith.constant 0 : index
    %3 = vector.load %arg3[%c0, %c0_1] : memref<5x32xf32, #tpu.memory_space<vmem>>, vector<1x32xf32>
    %c1 = arith.constant 1 : index
    %c0_2 = arith.constant 0 : index
    %4 = vector.load %arg3[%c1, %c0_2] : memref<5x32xf32, #tpu.memory_space<vmem>>, vector<1x32xf32>
    %c2 = arith.constant 2 : index
    %c0_3 = arith.constant 0 : index
    %5 = vector.load %arg3[%c2, %c0_3] : memref<5x32xf32, #tpu.memory_space<vmem>>, vector<1x32xf32>
    %c3 = arith.constant 3 : index
    %c0_4 = arith.constant 0 : index
    %6 = vector.load %arg3[%c3, %c0_4] : memref<5x32xf32, #tpu.memory_space<vmem>>, vector<1x32xf32>
    %c0_5 = arith.constant 0 : index
    %c0_6 = arith.constant 0 : index
    %7 = vector.load %arg1[%c0_5, %c0_6] : memref<8x16xf32, #tpu.memory_space<vmem>>, vector<8x16xf32>
    %c0_7 = arith.constant 0 : index
    %c0_8 = arith.constant 0 : index
    %8 = vector.load %arg2[%c0_7, %c0_8] : memref<16x32xf32, #tpu.memory_space<vmem>>, vector<16x32xf32>
    %cst = arith.constant dense<0.000000e+00> : vector<8x32xf32>
    %9 = tpu.matmul %7, %8, %cst {dimension_numbers = #tpu.dot_dimension_numbers<[1], [0], [0], [1], [0, 0, 1, 1], [], []>} : vector<8x16xf32>, vector<16x32xf32>, vector<8x32xf32> -> vector<8x32xf32>
    %10 = vector.broadcast %3 : vector<1x32xf32> to vector<8x32xf32>
    %11 = arith.addf %9, %10 : vector<8x32xf32>
    %cst_9 = arith.constant 0.000000e+00 : f32
    %12 = vector.broadcast %cst_9 : f32 to vector<8x32xf32>
    %13 = arith.maximumf %11, %12 : vector<8x32xf32>
    %cst_10 = arith.constant dense<0.000000e+00> : vector<8xf32>
    %14 = vector.multi_reduction <add>, %13, %cst_10 [1] : vector<8x32xf32> to vector<8xf32>
    %15 = vector.shape_cast %14 : vector<8xf32> to vector<8x1xf32>
    %cst_11 = arith.constant 3.200000e+01 : f32
    %16 = vector.broadcast %cst_11 : f32 to vector<8x1xf32>
    %17 = arith.divf %15, %16 : vector<8x1xf32>
    %18 = vector.broadcast %17 : vector<8x1xf32> to vector<8x32xf32>
    %19 = arith.subf %13, %18 : vector<8x32xf32>
    %20 = vector.broadcast %17 : vector<8x1xf32> to vector<8x32xf32>
    %21 = arith.subf %13, %20 : vector<8x32xf32>
    %22 = arith.mulf %19, %21 : vector<8x32xf32>
    %cst_12 = arith.constant dense<0.000000e+00> : vector<8xf32>
    %23 = vector.multi_reduction <add>, %22, %cst_12 [1] : vector<8x32xf32> to vector<8xf32>
    %24 = vector.shape_cast %23 : vector<8xf32> to vector<8x1xf32>
    %cst_13 = arith.constant 3.200000e+01 : f32
    %25 = vector.broadcast %cst_13 : f32 to vector<8x1xf32>
    %26 = arith.divf %24, %25 : vector<8x1xf32>
    %27 = vector.broadcast %17 : vector<8x1xf32> to vector<8x32xf32>
    %28 = arith.subf %13, %27 : vector<8x32xf32>
    %cst_14 = arith.constant 9.99999974E-6 : f32
    %29 = vector.broadcast %cst_14 : f32 to vector<8x1xf32>
    %30 = arith.addf %26, %29 : vector<8x1xf32>
    %31 = math.rsqrt %30 : vector<8x1xf32>
    %32 = vector.broadcast %31 : vector<8x1xf32> to vector<8x32xf32>
    %33 = arith.mulf %28, %32 : vector<8x32xf32>
    %34 = vector.broadcast %4 : vector<1x32xf32> to vector<8x32xf32>
    %35 = arith.mulf %33, %34 : vector<8x32xf32>
    %36 = vector.broadcast %5 : vector<1x32xf32> to vector<8x32xf32>
    %37 = arith.addf %35, %36 : vector<8x32xf32>
    %38 = vector.broadcast %6 : vector<1x32xf32> to vector<8x32xf32>
    %39 = arith.mulf %37, %38 : vector<8x32xf32>
    %cst_15 = arith.constant dense<0.000000e+00> : vector<8xf32>
    %40 = vector.multi_reduction <add>, %39, %cst_15 [1] : vector<8x32xf32> to vector<8xf32>
    %41 = vector.shape_cast %40 : vector<8xf32> to vector<8x1xf32>
    %c0_16 = arith.constant 0 : index
    %42 = memref.load %arg4[%c0_16] : memref<7xf32, #tpu.memory_space<smem>>
    %43 = vector.broadcast %42 : f32 to vector<8x1xf32>
    %44 = arith.addf %41, %43 : vector<8x1xf32>
    %c0_17 = arith.constant 0 : index
    %c0_18 = arith.constant 0 : index
    %45 = vector.load %arg6[%c0_17, %c0_18] : memref<1x1xf32, #tpu.memory_space<vmem>>, vector<1x1xf32>
    %cst_19 = arith.constant dense<0xFF800000> : vector<1xf32>
    %46 = vector.multi_reduction <maximumf>, %44, %cst_19 [0] : vector<8x1xf32> to vector<1xf32>
    %47 = vector.shape_cast %46 : vector<1xf32> to vector<1x1xf32>
    %48 = arith.maximumf %45, %47 : vector<1x1xf32>
    %49 = arith.subf %45, %48 : vector<1x1xf32>
    %50 = math.exp %49 : vector<1x1xf32>
    %51 = vector.broadcast %48 : vector<1x1xf32> to vector<8x1xf32>
    %52 = arith.subf %44, %51 : vector<8x1xf32>
    %53 = math.exp %52 : vector<8x1xf32>
    %c0_20 = arith.constant 0 : index
    %c0_21 = arith.constant 0 : index
    %54 = vector.load %arg7[%c0_20, %c0_21] : memref<1x1xf32, #tpu.memory_space<vmem>>, vector<1x1xf32>
    %55 = arith.mulf %50, %54 : vector<1x1xf32>
    %cst_22 = arith.constant dense<0.000000e+00> : vector<1xf32>
    %56 = vector.multi_reduction <add>, %53, %cst_22 [0] : vector<8x1xf32> to vector<1xf32>
    %57 = vector.shape_cast %56 : vector<1xf32> to vector<1x1xf32>
    %58 = arith.addf %55, %57 : vector<1x1xf32>
    %c0_23 = arith.constant 0 : index
    %c0_24 = arith.constant 0 : index
    %59 = vector.load %arg7[%c0_23, %c0_24] : memref<1x1xf32, #tpu.memory_space<vmem>>, vector<1x1xf32>
    tpu.vector_store %arg7[%c0_23, %c0_24], %58 {strides = array<i32>} : memref<1x1xf32, #tpu.memory_space<vmem>>, vector<1x1xf32>,
    %c0_25 = arith.constant 0 : index
    %c0_26 = arith.constant 0 : index
    %60 = vector.load %arg8[%c0_25, %c0_26] : memref<1x32xf32, #tpu.memory_space<vmem>>, vector<1x32xf32>
    %61 = vector.broadcast %50 : vector<1x1xf32> to vector<1x32xf32>
    %62 = arith.mulf %61, %60 : vector<1x32xf32>
    %63 = vector.broadcast %53 : vector<8x1xf32> to vector<8x32xf32>
    %64 = arith.mulf %63, %37 : vector<8x32xf32>
    %cst_27 = arith.constant dense<0.000000e+00> : vector<32xf32>
    %65 = vector.multi_reduction <add>, %64, %cst_27 [0] : vector<8x32xf32> to vector<32xf32>
    %66 = vector.shape_cast %65 : vector<32xf32> to vector<1x32xf32>
    %67 = arith.addf %62, %66 : vector<1x32xf32>
    %c0_28 = arith.constant 0 : index
    %c0_29 = arith.constant 0 : index
    %68 = vector.load %arg8[%c0_28, %c0_29] : memref<1x32xf32, #tpu.memory_space<vmem>>, vector<1x32xf32>
    tpu.vector_store %arg8[%c0_28, %c0_29], %67 {strides = array<i32>} : memref<1x32xf32, #tpu.memory_space<vmem>>, vector<1x32xf32>,
    %c0_30 = arith.constant 0 : index
    %c0_31 = arith.constant 0 : index
    %69 = vector.load %arg6[%c0_30, %c0_31] : memref<1x1xf32, #tpu.memory_space<vmem>>, vector<1x1xf32>
    tpu.vector_store %arg6[%c0_30, %c0_31], %48 {strides = array<i32>} : memref<1x1xf32, #tpu.memory_space<vmem>>, vector<1x1xf32>,
    %c0_32 = arith.constant 0 : index
    %c0_33 = arith.constant 0 : index
    %70 = vector.load %arg9[%c0_32, %c0_33] : memref<1x32xf32, #tpu.memory_space<vmem>>, vector<1x32xf32>
    %cst_34 = arith.constant dense<0.000000e+00> : vector<32xf32>
    %71 = vector.multi_reduction <add>, %37, %cst_34 [0] : vector<8x32xf32> to vector<32xf32>
    %72 = vector.shape_cast %71 : vector<32xf32> to vector<1x32xf32>
    %73 = arith.addf %70, %72 : vector<1x32xf32>
    %c0_35 = arith.constant 0 : index
    %c0_36 = arith.constant 0 : index
    %74 = vector.load %arg9[%c0_35, %c0_36] : memref<1x32xf32, #tpu.memory_space<vmem>>, vector<1x32xf32>
    tpu.vector_store %arg9[%c0_35, %c0_36], %73 {strides = array<i32>} : memref<1x32xf32, #tpu.memory_space<vmem>>, vector<1x32xf32>,
    %c0_37 = arith.constant 0 : index
    %c0_38 = arith.constant 0 : index
    %75 = vector.load %arg10[%c0_37, %c0_38] : memref<1x32xf32, #tpu.memory_space<vmem>>, vector<1x32xf32>
    %cst_39 = arith.constant dense<0xFF800000> : vector<32xf32>
    %76 = vector.multi_reduction <maximumf>, %37, %cst_39 [0] : vector<8x32xf32> to vector<32xf32>
    %77 = vector.shape_cast %76 : vector<32xf32> to vector<1x32xf32>
    %78 = arith.maximumf %75, %77 : vector<1x32xf32>
    %c0_40 = arith.constant 0 : index
    %c0_41 = arith.constant 0 : index
    %79 = vector.load %arg10[%c0_40, %c0_41] : memref<1x32xf32, #tpu.memory_space<vmem>>, vector<1x32xf32>
    tpu.vector_store %arg10[%c0_40, %c0_41], %78 {strides = array<i32>} : memref<1x32xf32, #tpu.memory_space<vmem>>, vector<1x32xf32>,
    %c0_42 = arith.constant 0 : index
    %c0_43 = arith.constant 0 : index
    %80 = vector.load %arg11[%c0_42, %c0_43] : memref<1x32xf32, #tpu.memory_space<vmem>>, vector<1x32xf32>
    %cst_44 = arith.constant dense<0x7F800000> : vector<32xf32>
    %81 = vector.multi_reduction <minimumf>, %37, %cst_44 [0] : vector<8x32xf32> to vector<32xf32>
    %82 = vector.shape_cast %81 : vector<32xf32> to vector<1x32xf32>
    %83 = arith.minimumf %80, %82 : vector<1x32xf32>
    %c0_45 = arith.constant 0 : index
    %c0_46 = arith.constant 0 : index
    %84 = vector.load %arg11[%c0_45, %c0_46] : memref<1x32xf32, #tpu.memory_space<vmem>>, vector<1x32xf32>
    tpu.vector_store %arg11[%c0_45, %c0_46], %83 {strides = array<i32>} : memref<1x32xf32, #tpu.memory_space<vmem>>, vector<1x32xf32>,
    %c0_i32_47 = arith.constant 0 : i32
    %85 = arith.cmpi eq, %arg0, %c0_i32_47 : i32
    %86 = arith.extui %85 : i1 to i32
    %c0_i32_48 = arith.constant 0 : i32
    %87 = arith.cmpi ne, %86, %c0_i32_48 : i32
    scf.if %87 {
      %c4 = arith.constant 4 : index
      %c0_49 = arith.constant 0 : index
      %88 = vector.load %arg3[%c4, %c0_49] : memref<5x32xf32, #tpu.memory_space<vmem>>, vector<1x32xf32>
      %c0_50 = arith.constant 0 : index
      %c0_51 = arith.constant 0 : index
      %89 = vector.load %arg7[%c0_50, %c0_51] : memref<1x1xf32, #tpu.memory_space<vmem>>, vector<1x1xf32>
      %90 = tpu.reciprocal %89 {approx = true} : vector<1x1xf32> -> vector<1x1xf32>
      %91 = arith.mulf %89, %90 : vector<1x1xf32>
      %cst_52 = arith.constant 2.000000e+00 : f32
      %92 = vector.broadcast %cst_52 : f32 to vector<1x1xf32>
      %93 = arith.subf %92, %91 : vector<1x1xf32>
      %94 = arith.mulf %90, %93 : vector<1x1xf32>
      %c0_53 = arith.constant 0 : index
      %c0_54 = arith.constant 0 : index
      %95 = vector.load %arg8[%c0_53, %c0_54] : memref<1x32xf32, #tpu.memory_space<vmem>>, vector<1x32xf32>
      %96 = vector.broadcast %94 : vector<1x1xf32> to vector<1x32xf32>
      %97 = arith.mulf %95, %96 : vector<1x32xf32>
      %c0_55 = arith.constant 0 : index
      %c0_56 = arith.constant 0 : index
      %98 = vector.load %arg9[%c0_55, %c0_56] : memref<1x32xf32, #tpu.memory_space<vmem>>, vector<1x32xf32>
      %cst_57 = arith.constant 1.250000e-01 : f32
      %99 = vector.broadcast %cst_57 : f32 to vector<1x32xf32>
      %100 = arith.mulf %98, %99 : vector<1x32xf32>
      %c0_58 = arith.constant 0 : index
      %c0_59 = arith.constant 0 : index
      %101 = vector.load %arg10[%c0_58, %c0_59] : memref<1x32xf32, #tpu.memory_space<vmem>>, vector<1x32xf32>
      %c0_60 = arith.constant 0 : index
      %c0_61 = arith.constant 0 : index
      %102 = vector.load %arg11[%c0_60, %c0_61] : memref<1x32xf32, #tpu.memory_space<vmem>>, vector<1x32xf32>
      %c3_62 = arith.constant 3 : index
      %103 = memref.load %arg4[%c3_62] : memref<7xf32, #tpu.memory_space<smem>>
      %104 = vector.broadcast %103 : f32 to vector<1x32xf32>
      %105 = arith.mulf %104, %97 : vector<1x32xf32>
      %c4_63 = arith.constant 4 : index
      %106 = memref.load %arg4[%c4_63] : memref<7xf32, #tpu.memory_space<smem>>
      %107 = vector.broadcast %106 : f32 to vector<1x32xf32>
      %108 = arith.mulf %107, %100 : vector<1x32xf32>
      %109 = arith.addf %105, %108 : vector<1x32xf32>
      %c5 = arith.constant 5 : index
      %110 = memref.load %arg4[%c5] : memref<7xf32, #tpu.memory_space<smem>>
      %111 = vector.broadcast %110 : f32 to vector<1x32xf32>
      %112 = arith.mulf %111, %101 : vector<1x32xf32>
      %113 = arith.addf %109, %112 : vector<1x32xf32>
      %c6 = arith.constant 6 : index
      %114 = memref.load %arg4[%c6] : memref<7xf32, #tpu.memory_space<smem>>
      %115 = vector.broadcast %114 : f32 to vector<1x32xf32>
      %116 = arith.mulf %115, %102 : vector<1x32xf32>
      %117 = arith.addf %113, %116 : vector<1x32xf32>
      %c1_64 = arith.constant 1 : index
      %118 = memref.load %arg4[%c1_64] : memref<7xf32, #tpu.memory_space<smem>>
      %119 = vector.broadcast %118 : f32 to vector<1x32xf32>
      %120 = arith.addf %117, %119 : vector<1x32xf32>
      %cst_65 = arith.constant 0.000000e+00 : f32
      %121 = vector.broadcast %cst_65 : f32 to vector<1x32xf32>
      %122 = arith.maximumf %120, %121 : vector<1x32xf32>
      %123 = arith.mulf %122, %88 : vector<1x32xf32>
      %cst_66 = arith.constant dense<0.000000e+00> : vector<1xf32>
      %124 = vector.multi_reduction <add>, %123, %cst_66 [1] : vector<1x32xf32> to vector<1xf32>
      %125 = vector.shape_cast %124 : vector<1xf32> to vector<1x1xf32>
      %c2_67 = arith.constant 2 : index
      %126 = memref.load %arg4[%c2_67] : memref<7xf32, #tpu.memory_space<smem>>
      %127 = vector.broadcast %126 : f32 to vector<1x1xf32>
      %128 = arith.addf %125, %127 : vector<1x1xf32>
      %c0_68 = arith.constant 0 : index
      %c0_69 = arith.constant 0 : index
      %129 = vector.load %arg5[%c0_68, %c0_69] : memref<1x1xf32, #tpu.memory_space<vmem>>, vector<1x1xf32>
      tpu.vector_store %arg5[%c0_68, %c0_69], %128 {strides = array<i32>} : memref<1x1xf32, #tpu.memory_space<vmem>>, vector<1x1xf32>,
    } else {
    }
    return
  }
  func.func @transform_0(%arg0: i32) -> (i32, i32) {
    %c0_i32 = arith.constant 0 : i32
    %c0_i32_0 = arith.constant 0 : i32
    return %arg0, %c0_i32 : i32, i32
  }
  func.func @transform_1(%arg0: i32) -> (i32, i32) {
    %c0_i32 = arith.constant 0 : i32
    %c0_i32_0 = arith.constant 0 : i32
    %c0_i32_1 = arith.constant 0 : i32
    return %c0_i32, %c0_i32_0 : i32, i32
  }
  func.func @transform_2(%arg0: i32) -> (i32, i32) {
    %c0_i32 = arith.constant 0 : i32
    %c0_i32_0 = arith.constant 0 : i32
    %c0_i32_1 = arith.constant 0 : i32
    return %c0_i32, %c0_i32_0 : i32, i32
  }
  func.func @transform_3(%arg0: i32) -> i32 {
    %c0_i32 = arith.constant 0 : i32
    %c0_i32_0 = arith.constant 0 : i32
    return %c0_i32 : i32
  }
  func.func @transform_4(%arg0: i32) -> (i32, i32) {
    %c0_i32 = arith.constant 0 : i32
    %c0_i32_0 = arith.constant 0 : i32
    %c0_i32_1 = arith.constant 0 : i32
    return %c0_i32, %c0_i32_0 : i32, i32
  }
}

</mosaic_0001>

<llo_original>
// kernel: tpu_custom_call.1
$region0: #{tpu_custom_call.1}
  #allocation0 [shape = 'u32[]', space=smem, size = 0x4, offset = 0x4, fixed_abs, tag = 'smem constant byte address 0x4 - core index']
  #allocation1 [shape = 'u32[144,128]{1,0:T(1,128)}', space=vmem, size = 0x12000, scoped, tag = 'internal scratch']
  #allocation2 [shape = 'f32[1,1]{1,0:T(1,128)}', space=vmem, size = 0x200, scoped, tag = 'scratch operand']
  #allocation3 [shape = 'f32[1,1]{1,0:T(1,128)}', space=vmem, size = 0x200, scoped, tag = 'scratch operand']
  #allocation4 [shape = 'f32[1,32]{1,0:T(1,128)}', space=vmem, size = 0x200, scoped, tag = 'scratch operand']
  #allocation5 [shape = 'f32[1,32]{1,0:T(1,128)}', space=vmem, size = 0x200, scoped, tag = 'scratch operand']
  #allocation6 [shape = 'f32[1,32]{1,0:T(1,128)}', space=vmem, size = 0x200, scoped, tag = 'scratch operand']
  #allocation7 [shape = 'f32[1,32]{1,0:T(1,128)}', space=vmem, size = 0x200, scoped, tag = 'scratch operand']
  %s0 = inlined_call_operand.hbm [shape: f32[8,16], index: 0, kind: input, shape index: {}]
  %s1 = inlined_call_operand.hbm [shape: f32[16,32], index: 1, kind: input, shape index: {}]
  %s2 = inlined_call_operand.hbm [shape: f32[5,32], index: 2, kind: input, shape index: {}]
  %s3 = inlined_call_operand.vmem [shape: f32[7], index: 3, kind: input, shape index: {}]
  %s4 = inlined_call_operand.hbm [shape: f32[1,1], index: 4, kind: output, shape index: {}]
  %s5 = sld [smem:[#allocation0]]
  $region50: #{tpu_custom_call.1} parent=0
    _
  %s7 = ssub.s32 1, %s5
  %s8 = scalar_select 0, %s7, %s5
  $region1: #{tpu_custom_call.1} parent=0
    #allocation8 [shape = 'u8[4096]{0}', space=vmem, size = 0x1000, scoped, tag = 'input window, operand 0, single buffered']
    #allocation9 [shape = 's32[1]{0}', space=sflag, size = 0x4, scoped, tag = 'scoped memory for tpu_custom_call.1']
    #allocation10 [shape = 's32[1]{0}', space=sflag, size = 0x4, scoped, tag = 'scoped memory for tpu_custom_call.1']
    #allocation11 [shape = 's32[1]{0}', space=sflag, size = 0x4, scoped, tag = 'scoped memory for tpu_custom_call.1']
    #allocation12 [shape = 'u8[8192]{0}', space=vmem, size = 0x2000, scoped, tag = 'input window, operand 1, single buffered']
    #allocation13 [shape = 's32[1]{0}', space=sflag, size = 0x4, scoped, tag = 'scoped memory for tpu_custom_call.1']
    #allocation14 [shape = 'u8[4096]{0}', space=vmem, size = 0x1000, scoped, tag = 'input window, operand 2, single buffered']
    #allocation15 [shape = 'u8[512]{0}', space=smem, size = 0x200, scoped, tag = 'input window, operand 3, single buffered']
    #allocation16 [shape = 'u8[512]{0}', space=vmem, size = 0x400, scoped, tag = 'output window, operand 0, single buffered']
    %9 = vsyncpa [#allocation9], 0
    %10 = vsyncpa [#allocation13], 0
    %11 = vsyncpa [#allocation11], 0
    %12 = vsyncpa [#allocation10], 0
    // Predicated region
    $region2: #{tpu_custom_call.1} parent=1 // pred_check
      _
    $region3: #{tpu_custom_call.1} parent=1 // pred_check_branch
      %14 = sbr.rel (0) target = $region5
    $region4: #{tpu_custom_call.1} parent=1 // pred_region
      %s16 = ssub.s32 128, 128
      %17 = vsyncadd [#allocation9], %s16
      %s19 = sshll.u32 [#allocation8], 4
      %s20 = int_to_ptr.vmem [resolvable:$true] %s19
      %22 = dma.hbm_to_vmem [thread:$0]  %s0, 128, %s20, [#allocation9]
    $region5: #{tpu_custom_call.1} parent=1 // pred_fallthru
      _
    // Predicated region
    $region6: #{tpu_custom_call.1} parent=1 // pred_check
      _
    $region7: #{tpu_custom_call.1} parent=1 // pred_check_branch
      %24 = sbr.rel (0) target = $region9
    $region8: #{tpu_custom_call.1} parent=1 // pred_region
      %s26 = ssub.s32 256, 256
      %27 = vsyncadd [#allocation13], %s26
      %s28 = sshll.u32 [#allocation12], 4
      %s29 = int_to_ptr.vmem [resolvable:$true] %s28
      %34 = dma.hbm_to_vmem [thread:$0]  %s1, 256, %s29, [#allocation13], 128, 128, 8
    $region9: #{tpu_custom_call.1} parent=1 // pred_fallthru
      _
    // Predicated region
    $region10: #{tpu_custom_call.1} parent=1 // pred_check
      _
    $region11: #{tpu_custom_call.1} parent=1 // pred_check_branch
      %36 = sbr.rel (0) target = $region13
    $region12: #{tpu_custom_call.1} parent=1 // pred_region
      %s38 = ssub.s32 128, 128
      %39 = vsyncadd [#allocation13], %s38
      %s41 = sshll.u32 [#allocation14], 4
      %s42 = int_to_ptr.vmem [resolvable:$true] %s41
      %44 = dma.hbm_to_vmem [thread:$0]  %s2, 128, %s42, [#allocation13]
    $region13: #{tpu_custom_call.1} parent=1 // pred_fallthru
      _
    // Predicated region
    $region14: #{tpu_custom_call.1} parent=1 // pred_check
      _
    $region15: #{tpu_custom_call.1} parent=1 // pred_check_branch
      %46 = sbr.rel (0) target = $region17
    $region16: #{tpu_custom_call.1} parent=1 // pred_region
      %s48 = ssub.s32 16, 16
      %49 = vsyncadd [#allocation11], %s48
      %s51 = sshll.u32 %s3, 4
      %s52 = int_to_ptr.vmem [resolvable:$true] %s51
      %54 = dma.vmem_to_smem %s52, 16, [#allocation15], [#allocation11]
    $region17: #{tpu_custom_call.1} parent=1 // pred_fallthru
      _
    // Predicated region
    $region18: #{tpu_custom_call.1} parent=1 // pred_check
      _
    $region19: #{tpu_custom_call.1} parent=1 // pred_check_branch
      %56 = sbr.rel (0) target = $region21
    $region20: #{tpu_custom_call.1} parent=1 // pred_region
      %57 = dma.done [#allocation9], 128
    $region21: #{tpu_custom_call.1} parent=1 // pred_fallthru
      _
    // Predicated region
    $region22: #{tpu_custom_call.1} parent=1 // pred_check
      _
    $region23: #{tpu_custom_call.1} parent=1 // pred_check_branch
      %59 = sbr.rel (0) target = $region25
    $region24: #{tpu_custom_call.1} parent=1 // pred_region
      %60 = dma.done [#allocation13], 256
    $region25: #{tpu_custom_call.1} parent=1 // pred_fallthru
      _
    // Predicated region
    $region26: #{tpu_custom_call.1} parent=1 // pred_check
      _
    $region27: #{tpu_custom_call.1} parent=1 // pred_check_branch
      %62 = sbr.rel (0) target = $region29
    $region28: #{tpu_custom_call.1} parent=1 // pred_region
      %63 = dma.done [#allocation13], 128
    $region29: #{tpu_custom_call.1} parent=1 // pred_fallthru
      _
    // Predicated region
    $region30: #{tpu_custom_call.1} parent=1 // pred_check
      _
    $region31: #{tpu_custom_call.1} parent=1 // pred_check_branch
      %65 = sbr.rel (0) target = $region33
    $region32: #{tpu_custom_call.1} parent=1 // pred_region
      %66 = dma.done [#allocation11], 16
    $region33: #{tpu_custom_call.1} parent=1 // pred_fallthru
      _
    %67 = sfence
    %p68 = scmp.eq.s32.totalorder 0, 0
    // Predicated region
    $region34: #{tpu_custom_call.1} parent=1 // pred_check
      %p69 = pneg %p68
    $region35: #{tpu_custom_call.1} parent=1 // pred_check_branch
      %71 = sbr.rel (%p69) target = $region37
    $region36: #{tpu_custom_call.1} parent=1 // pred_region
      %vm72 = vcmask 0
      %73 = vst.msk [vmem:[#allocation2] sm:$0x1] %vm72, -inf
      %74 = vst.msk [vmem:[#allocation3] sm:$0x1] %vm72, 0.0
      %vm75 = vcmask 253952
      %76 = vst.msk [vmem:[#allocation4] sm:$0x1] %vm75, 0.0
      %77 = vst.msk [vmem:[#allocation5] sm:$0x1] %vm75, 0.0
      %78 = vst.msk [vmem:[#allocation6] sm:$0x1] %vm75, -inf
      %79 = vst.msk [vmem:[#allocation7] sm:$0x1] %vm75, inf
    $region37: #{tpu_custom_call.1} parent=1 // pred_fallthru
      _
    %v80 = vld [vmem:[#allocation14] sm:$0x1]
    %v81 = vld [vmem:[#allocation14 + $0x1] sm:$0x1]
    %v82 = vld [vmem:[#allocation14 + $0x2] sm:$0x1]
    %v83 = vld [vmem:[#allocation14 + $0x3] sm:$0x1]
    %v84 = vld [vmem:[#allocation8] sm:$0xff]
    %v85 = vld [vmem:[#allocation12] sm:$0xff]
    %v86 = vld [vmem:[#allocation12 + $0x8] sm:$0xff]
    %v87 = vlaneseq
    %v88 = vshrl.u32 %v87, 7
    %v89 = vsub.s32 0, %v88
    %v90 = vrot.slane %v80, %v89
    %vm91 = vcmask 130048
    %v93 = vsel %vm91, %v84, 0
    %95 = vmatprep.subr.mxu0 0.0
    %96 = vmatpush1.msra.mxu0 %v85
    %97 = vmatprep.subr.mxu0 0.0
    %98 = vmatpush1.msra.mxu0 %v86
    %99 = vmatprep.subr.mxu0 0.0
    %100 = vmatpush1.msra.mxu0 0.0
    %101 = vmatprep.subr.mxu0 0.0
    %102 = vmatpush1.msra.mxu0 0.0
    %103 = vmatprep.subr.mxu0 0.0
    %104 = vmatpush1.msra.mxu0 0.0
    %105 = vmatprep.subr.mxu0 0.0
    %106 = vmatpush1.msra.mxu0 0.0
    %107 = vmatprep.subr.mxu0 0.0
    %108 = vmatpush1.msra.mxu0 0.0
    %109 = vmatprep.subr.mxu0 0.0
    %110 = vmatpush1.msra.mxu0 0.0
    %111 = vmatprep.subr.mxu0 0.0
    %112 = vmatpush1.msra.mxu0 0.0
    %113 = vmatprep.subr.mxu0 0.0
    %114 = vmatpush1.msra.mxu0 0.0
    %115 = vmatprep.subr.mxu0 0.0
    %116 = vmatpush1.msra.mxu0 0.0
    %117 = vmatprep.subr.mxu0 0.0
    %118 = vmatpush1.msra.mxu0 0.0
    %119 = vmatprep.subr.mxu0 0.0
    %120 = vmatpush1.msra.mxu0 0.0
    %121 = vmatprep.subr.mxu0 0.0
    %122 = vmatpush1.msra.mxu0 0.0
    %123 = vmatprep.subr.mxu0 0.0
    %124 = vmatpush1.msra.mxu0 0.0
    %125 = vmatprep.subr.mxu0 0.0
    %126 = vmatpush1.msra.mxu0 0.0
    %127 = vmatprep.subr.mxu0 0.0
    %128 = vmatpush1.msra.mxu0 0.0
    %129 = vmatprep.subr.mxu0 0.0
    %130 = vmatpush1.msra.mxu0 0.0
    %131 = vmatprep.subr.mxu0 0.0
    %132 = vmatpush1.msra.mxu0 0.0
    %133 = vmatprep.subr.mxu0 0.0
    %134 = vmatpush1.msra.mxu0 0.0
    %135 = vmatprep.subr.mxu0 0.0
    %136 = vmatpush1.msra.mxu0 0.0
    %137 = vmatprep.subr.mxu0 0.0
    %138 = vmatpush1.msra.mxu0 0.0
    %139 = vmatprep.subr.mxu0 0.0
    %140 = vmatpush1.msra.mxu0 0.0
    %141 = vmatprep.subr.mxu0 0.0
    %142 = vmatpush1.msra.mxu0 0.0
    %143 = vmatprep.subr.mxu0 0.0
    %144 = vmatpush1.msra.mxu0 0.0
    %145 = vmatprep.subr.mxu0 0.0
    %146 = vmatpush1.msra.mxu0 0.0
    %147 = vmatprep.subr.mxu0 0.0
    %148 = vmatpush1.msra.mxu0 0.0
    %149 = vmatprep.subr.mxu0 0.0
    %150 = vmatpush1.msra.mxu0 0.0
    %151 = vmatprep.subr.mxu0 0.0
    %152 = vmatpush1.msra.mxu0 0.0
    %153 = vmatprep.subr.mxu0 0.0
    %154 = vmatpush1.msra.mxu0 0.0
    %155 = vmatprep.subr.mxu0 0.0
    %156 = vmatpush1.msra.mxu0 0.0
    %157 = vmatprep.subr.mxu0 0.0
    %158 = vmatpush1.msra.mxu0 0.0
    %159 = vmatprep.mubr.f32.mxu0 0.0
    %160 = vmatmul.mubr.f32.gmra.mrb[0].mxu0 %v93
    %v161 = vpop.f32.mrb[0].mxu0
    %v162 = vadd.f32 %v90, %v161
    %v163 = vpop.f32.mrb[0].mxu0
    %164 = vdwg.mxu0
    %v165 = vmax.f32 %v162, 0.0
    %vm166 = vcmask 261120
    %v167 = vsel %vm166, %v165, 0.0
    %168 = vadd.xlane.f32.xlu0 %v167
    %v169 = vpop.xlane.xlu0 %168
    %v170 = vrcp.pop 32.0
    %v171 = vmul.f32 %v169, %v170
    %v172 = vsub.f32 %v165, %v171
    %v173 = vmul.f32 %v172, %v172
    %v174 = vsel %vm166, %v173, 0.0
    %175 = vadd.xlane.f32.xlu0 %v174
    %v176 = vpop.xlane.xlu0 %175
    %v177 = vmul.f32 %v176, %v170
    %v178 = vadd.f32 %v177, 1e-05
    %v179 = vrsqrt.pop %v178
    %v180 = vmul.f32 %v172, %v179
    %v181 = vlaneseq
    %v182 = vshrl.u32 %v181, 7
    %v183 = vsub.s32 0, %v182
    %v184 = vrot.slane %v81, %v183
    %v185 = vmul.f32 %v180, %v184
    %v186 = vlaneseq
    %v187 = vshrl.u32 %v186, 7
    %v188 = vsub.s32 0, %v187
    %v189 = vrot.slane %v82, %v188
    %v190 = vadd.f32 %v185, %v189
    %v191 = vlaneseq
    %v192 = vshrl.u32 %v191, 7
    %v193 = vsub.s32 0, %v192
    %v194 = vrot.slane %v83, %v193
    %v195 = vmul.f32 %v190, %v194
    %v196 = vsel %vm166, %v195, 0.0
    %197 = vadd.xlane.f32.xlu0 %v196
    %v198 = vpop.xlane.xlu0 %197
    %s199 = sld [smem:[#allocation15]]
    %v200 = vstv %s199
    %v201 = vadd.f32 %v198, %v200
    %v202 = vld [vmem:[#allocation2] sm:$0x1]
    %v203 = vrot.slane %v201, 4
    %v204 = vmax.f32 %v201, %v203
    %v205 = vrot.slane %v204, 2
    %v206 = vmax.f32 %v204, %v205
    %v207 = vrot.slane %v206, 1
    %v208 = vmax.f32 %v206, %v207
    %v209 = vmax.f32 %v202, %v208
    %v210 = vsub.f32 %v202, %v209
    %v211 = vmul.f32 %v210, 1.442695
    %v212 = vpow.pop %v211
    %v214 = vlaneseq
    %v215 = vshrl.u32 %v214, 7
    %v216 = vsub.s32 0, %v215
    %v217 = vrot.slane %v209, %v216
    %v219 = vsub.f32 %v201, %v217
    %v220 = vmul.f32 %v219, 1.442695
    %v221 = vpow.pop %v220
    %v222 = vld [vmem:[#allocation3] sm:$0x1]
    %v223 = vmul.f32 %v212, %v222
    %vm224 = vcmask 7168
    %v225 = vsel %vm224, %v221, 0.0
    %v226 = vrot.slane %v225, 4
    %v227 = vadd.f32 %v225, %v226
    %v228 = vrot.slane %v227, 2
    %v229 = vadd.f32 %v227, %v228
    %v230 = vrot.slane %v229, 1
    %v231 = vadd.f32 %v229, %v230
    %v232 = vadd.f32 %v223, %v231
    %vm233 = vcmask 0
    %234 = vst.msk [vmem:[#allocation3] sm:$0x1] %vm233, %v232
    %v235 = vld [vmem:[#allocation4] sm:$0x1]
    %237 = vset.pattern.permute.xlu0 0
    %238 = vperm.xlu0 %237, %v212
    %v239 = vpop.permute.xlu0 %238
    %v241 = vlaneseq
    %v242 = vshrl.u32 %v241, 7
    %v243 = vsub.s32 0, %v242
    %v244 = vrot.slane %v239, %v243
    %v245 = vmul.f32 %v244, %v235
    %247 = vset.pattern.permute.xlu0 0
    %248 = vperm.xlu0 %247, %v221
    %v249 = vpop.permute.xlu0 %248
    %v251 = vmul.f32 %v249, %v190
    %v252 = vsel %vm166, %v251, 0.0
    %v253 = vrot.slane %v252, 4
    %v254 = vadd.f32 %v252, %v253
    %v255 = vrot.slane %v254, 2
    %v256 = vadd.f32 %v254, %v255
    %v257 = vrot.slane %v256, 1
    %v258 = vadd.f32 %v256, %v257
    %v259 = vadd.f32 %v245, %v258
    %vm260 = vcmask 253952
    %261 = vst.msk [vmem:[#allocation4] sm:$0x1] %vm260, %v259
    %262 = vst.msk [vmem:[#allocation2] sm:$0x1] %vm233, %v209
    %v263 = vld [vmem:[#allocation5] sm:$0x1]
    %v264 = vsel %vm166, %v190, 0.0
    %v265 = vrot.slane %v264, 4
    %v266 = vadd.f32 %v264, %v265
    %v267 = vrot.slane %v266, 2
    %v268 = vadd.f32 %v266, %v267
    %v269 = vrot.slane %v268, 1
    %v270 = vadd.f32 %v268, %v269
    %v271 = vadd.f32 %v263, %v270
    %272 = vst.msk [vmem:[#allocation5] sm:$0x1] %vm260, %v271
    %v273 = vld [vmem:[#allocation6] sm:$0x1]
    %v274 = vsel %vm166, %v190, -inf
    %v275 = vrot.slane %v274, 4
    %v276 = vmax.f32 %v274, %v275
    %v277 = vrot.slane %v276, 2
    %v278 = vmax.f32 %v276, %v277
    %v279 = vrot.slane %v278, 1
    %v280 = vmax.f32 %v278, %v279
    %v281 = vmax.f32 %v273, %v280
    %282 = vst.msk [vmem:[#allocation6] sm:$0x1] %vm260, %v281
    %v283 = vld [vmem:[#allocation7] sm:$0x1]
    %v284 = vsel %vm166, %v190, inf
    %v285 = vrot.slane %v284, 4
    %v286 = vmin.f32 %v284, %v285
    %v287 = vrot.slane %v286, 2
    %v288 = vmin.f32 %v286, %v287
    %v289 = vrot.slane %v288, 1
    %v290 = vmin.f32 %v288, %v289
    %v291 = vmin.f32 %v283, %v290
    %292 = vst.msk [vmem:[#allocation7] sm:$0x1] %vm260, %v291
    // Predicated region
    $region38: #{tpu_custom_call.1} parent=1 // pred_check
      %p293 = pneg %p68
    $region39: #{tpu_custom_call.1} parent=1 // pred_check_branch
      %295 = sbr.rel (%p293) target = $region41
    $region40: #{tpu_custom_call.1} parent=1 // pred_region
      %v296 = vld [vmem:[#allocation14 + $0x4] sm:$0x1]
      %v297 = vld [vmem:[#allocation3] sm:$0x1]
      %v298 = vrcp.pop %v297
      %v299 = vmul.f32 %v297, %v298
      %v300 = vsub.f32 2.0, %v299
      %v301 = vmul.f32 %v298, %v300
      %v302 = vld [vmem:[#allocation4] sm:$0x1]
      %304 = vset.pattern.permute.xlu0 0
      %305 = vperm.xlu0 %304, %v301
      %v306 = vpop.permute.xlu0 %305
      %v308 = vlaneseq
      %v309 = vshrl.u32 %v308, 7
      %v310 = vsub.s32 0, %v309
      %v311 = vrot.slane %v306, %v310
      %v312 = vmul.f32 %v302, %v311
      %v313 = vld [vmem:[#allocation5] sm:$0x1]
      %v314 = vmul.f32 %v313, 0.125
      %v315 = vld [vmem:[#allocation6] sm:$0x1]
      %v316 = vld [vmem:[#allocation7] sm:$0x1]
      %s317 = sld [smem:[#allocation15 + $0x3]]
      %v318 = vstv %s317
      %v319 = vmul.f32 %v318, %v312
      %s320 = sld [smem:[#allocation15 + $0x4]]
      %v321 = vstv %s320
      %v322 = vmul.f32 %v321, %v314
      %v323 = vadd.f32 %v319, %v322
      %s324 = sld [smem:[#allocation15 + $0x5]]
      %v325 = vstv %s324
      %v326 = vmul.f32 %v325, %v315
      %v327 = vadd.f32 %v323, %v326
      %s328 = sld [smem:[#allocation15 + $0x6]]
      %v329 = vstv %s328
      %v330 = vmul.f32 %v329, %v316
      %v331 = vadd.f32 %v327, %v330
      %s332 = sld [smem:[#allocation15 + $0x1]]
      %v333 = vstv %s332
      %v334 = vadd.f32 %v331, %v333
      %v335 = vmax.f32 %v334, 0.0
      %v336 = vmul.f32 %v335, %v296
      %v337 = vsel %vm260, %v336, 0.0
      %338 = vadd.xlane.f32.xlu0 %v337
      %v339 = vpop.xlane.xlu0 %338
      %s340 = sld [smem:[#allocation15 + $0x2]]
      %v341 = vstv %s340
      %v342 = vadd.f32 %v339, %v341
      %343 = vst.msk [vmem:[#allocation16] sm:$0x1] %vm233, %v342
    $region41: #{tpu_custom_call.1} parent=1 // pred_fallthru
      _
    // Predicated region
    $region42: #{tpu_custom_call.1} parent=1 // pred_check
      _
    $region43: #{tpu_custom_call.1} parent=1 // pred_check_branch
      %345 = sbr.rel (0) target = $region45
    $region44: #{tpu_custom_call.1} parent=1 // pred_region
      %s347 = ssub.s32 16, 16
      %348 = vsyncadd [#allocation10], %s347
      %s350 = sshll.u32 [#allocation16], 4
      %s351 = int_to_ptr.vmem [resolvable:$true] %s350
      %353 = dma.vmem_to_hbm [thread:$0]  %s351, 16, %s4, [#allocation10]
    $region45: #{tpu_custom_call.1} parent=1 // pred_fallthru
      _
    // Predicated region
    $region46: #{tpu_custom_call.1} parent=1 // pred_check
      _
    $region47: #{tpu_custom_call.1} parent=1 // pred_check_branch
      %355 = sbr.rel (0) target = $region49
    $region48: #{tpu_custom_call.1} parent=1 // pred_region
      %356 = dma.done [#allocation10], 16
    $region49: #{tpu_custom_call.1} parent=1 // pred_fallthru
      _
    %357 = vsyncpa [#allocation9], 1
    %358 = vsyncpa [#allocation13], 1
    %359 = vsyncpa [#allocation10], 1
    %360 = vsyncpa [#allocation11], 1

</llo_original>
